<compile_context>
chip_gen: v6e
topology: v6e:2x2x1
jax: 0.10.0
libtpu: 0.0.40
codegen_flags: <defaults>
</compile_context>

<pallas_src>
import numpy as np
import jax
import jax.numpy as jnp
from jax.experimental import pallas as pl
from jax.experimental.pallas import tpu as pltpu

N_WIRES = 3
DIM = 1 << N_WIRES   # 8 basis states
LANES = 128


def _bit(i, w):
    # PennyLane default.qubit ordering: wire 0 is the most significant bit.
    return (i >> (N_WIRES - 1 - w)) & 1


def _cnot_mat(ctrl, tgt):
    M = np.zeros((DIM, DIM), np.float32)
    for i in range(DIM):
        b = [(i >> 2) & 1, (i >> 1) & 1, i & 1]
        if b[ctrl] == 1:
            b[tgt] ^= 1
        M[(b[0] << 2) | (b[1] << 1) | b[2], i] = 1.0
    return M


def qcircuit_kernel(u_ref, x_ref, o_ref):
    # u_ref : SMEM (64,) -- row-major flattened 8x8 real circuit unitary U
    #         (product of all CNOT / RY(theta) gates; x-independent).
    # x_ref : VMEM (2, S, 128) -- embedding angles, batch packed (sublane, lane).
    # o_ref : VMEM (3, S, 128) -- relu(<Z_w>) per wire.
    x0 = x_ref[0, :, :]
    x1 = x_ref[1, :, :]
    c0 = jnp.cos(0.5 * x0)
    s0 = jnp.sin(0.5 * x0)
    c1 = jnp.cos(0.5 * x1)
    s1 = jnp.sin(0.5 * x1)

    # State after AngleEmbedding (RX on wires 0,1 of |000>) -- a product state
    # with only 4 nonzero amplitudes (wire 0 = most significant bit):
    #   re[0] =  c0*c1,  re[6] = -s0*s1,  im[2] = -c0*s1,  im[4] = -s0*c1.
    a_r0 = c0 * c1
    a_r6 = -(s0 * s1)
    a_i2 = -(c0 * s1)
    a_i4 = -(s0 * c1)

    # Apply the precomposed real unitary U and accumulate the PauliZ expvals:
    #   re'[i] = U[i,0]*re[0] + U[i,6]*re[6]
    #   im'[i] = U[i,2]*im[2] + U[i,4]*im[4]
    #   <Z_w>  = sum_i (+/-1)_{w,i} * (re'[i]^2 + im'[i]^2)
    zs = [None] * N_WIRES
    for i in range(DIM):
        re_i = u_ref[8 * i + 0] * a_r0 + u_ref[8 * i + 6] * a_r6
        im_i = u_ref[8 * i + 2] * a_i2 + u_ref[8 * i + 4] * a_i4
        p_i = re_i * re_i + im_i * im_i
        for w in range(N_WIRES):
            plus = _bit(i, w) == 0
            if zs[w] is None:
                zs[w] = p_i if plus else -p_i
            elif plus:
                zs[w] = zs[w] + p_i
            else:
                zs[w] = zs[w] - p_i

    # Direct per-row stores (no sublane concat, no zero-pad rows).
    for w in range(N_WIRES):
        o_ref[w, :, :] = jnp.maximum(zs[w], 0.0)


def qmodel_forward(x, theta, n_layers, tb=8192):
    """x: (B, 2) f32, theta: (n_layers*6,) f32 -> (B, 3) f32 (= torch forward)."""
    x = jnp.asarray(x, jnp.float32)
    theta = jnp.asarray(theta, jnp.float32)
    B = x.shape[0]

    # ---- precompose the theta-only (real) 8x8 unitary: U = prod_l RY-layer @ CNOTs
    I2 = jnp.eye(2, dtype=jnp.float32)
    C01 = jnp.asarray(_cnot_mat(0, 1))
    C12 = jnp.asarray(_cnot_mat(1, 2))

    def ry2(a):
        c = jnp.cos(0.5 * a)
        s = jnp.sin(0.5 * a)
        return jnp.stack([jnp.stack([c, -s]), jnp.stack([s, c])])

    def on_wire(w, m2):
        mats = [I2, I2, I2]
        mats[w] = m2
        return jnp.kron(jnp.kron(mats[0], mats[1]), mats[2])

    U = jnp.eye(DIM, dtype=jnp.float32)
    for l in range(n_layers):
        L = C12 @ C01
        for i in range(N_WIRES):
            # theta index pattern l*n_wires + 2*i, exactly as in the module.
            L = on_wire(i, ry2(theta[l * N_WIRES + 2 * i])) @ L
        U = L @ U
    u_flat = U.reshape(-1)                    # (64,) row-major, SMEM prefetch

    # ---- pack batch across sublanes AND lanes: b -> (b // 128, b % 128)
    s_need = -(-B // LANES)                           # sublane rows needed
    s_tile = max(8, (-(-tb // LANES) // 8) * 8)       # rows per tile (mult of 8)
    s_tile = min(s_tile, -(-s_need // 8) * 8)         # don't over-pad tiny batches
    s_pad = -(-s_need // s_tile) * s_tile

    xt = jnp.zeros((2, s_pad * LANES), jnp.float32)
    xt = xt.at[:, :B].set(x.T)
    xt = xt.reshape(2, s_pad, LANES)

    out = pl.pallas_call(
        qcircuit_kernel,
        out_shape=jax.ShapeDtypeStruct((N_WIRES, s_pad, LANES), jnp.float32),
        grid_spec=pltpu.PrefetchScalarGridSpec(
            num_scalar_prefetch=1,
            grid=(s_pad // s_tile,),
            in_specs=[pl.BlockSpec((2, s_tile, LANES), lambda i, u: (0, i, 0))],
            out_specs=pl.BlockSpec((N_WIRES, s_tile, LANES),
                                   lambda i, u: (0, i, 0)),
        ),
        compiler_params=pltpu.CompilerParams(
            dimension_semantics=("parallel",)),
    )(u_flat, xt)

    return out.reshape(N_WIRES, s_pad * LANES)[:, :B].T


# ---------------- pure numpy reference (for correctness check) ----------------
def _ref_forward(x, theta, n_layers):
    x = np.asarray(x, np.float64)
    theta = np.asarray(theta, np.float64)
    I = np.eye(2, dtype=complex)

    def rx(a):
        c, s = np.cos(a / 2), np.sin(a / 2)
        return np.array([[c, -1j * s], [-1j * s, c]])

    def ry(a):
        c, s = np.cos(a / 2), np.sin(a / 2)
        return np.array([[c, -s], [s, c]])

    def on(w, U):
        mats = [I, I, I]
        mats[w] = U
        return np.kron(np.kron(mats[0], mats[1]), mats[2])

    B = x.shape[0]
    out = np.zeros((B, N_WIRES), np.float64)
    c01 = _cnot_mat(0, 1).astype(np.float64)
    c12 = _cnot_mat(1, 2).astype(np.float64)
    for b in range(B):
        st = np.zeros(DIM, dtype=complex)
        st[0] = 1.0
        st = on(0, rx(x[b, 0])) @ st
        st = on(1, rx(x[b, 1])) @ st
        for l in range(n_layers):
            st = c01 @ st
            st = c12 @ st
            for i in range(N_WIRES):
                st = on(i, ry(theta[l * N_WIRES + i * 2])) @ st
        p = np.abs(st) ** 2
        for w in range(N_WIRES):
            signs = np.array([1.0 if _bit(i, w) == 0 else -1.0
                              for i in range(DIM)])
            out[b, w] = np.sum(signs * p)
    return np.maximum(out, 0.0).astype(np.float32)


if __name__ == "__main__":
    key = jax.random.PRNGKey(0)
    kx, kt, kx2, kt2 = jax.random.split(key, 4)

    # --- small primary check: batch=8, n_layers=2 (matches module defaults) ---
    n_layers = 2
    batch = 8
    x = jax.random.uniform(kx, (batch, 2), dtype=jnp.float32)
    theta = jax.random.uniform(kt, (n_layers * N_WIRES * 2,), dtype=jnp.float32)

    y = qmodel_forward(x, theta, n_layers)
    y = jax.block_until_ready(y)
    y_ref = _ref_forward(np.asarray(x), np.asarray(theta), n_layers)
    np.testing.assert_allclose(np.asarray(y), y_ref, rtol=1e-4, atol=1e-5)

    # --- secondary check: non-multiple-of-128 batch exercises lane padding ---
    n_layers2 = 3
    batch2 = 300
    x2 = jax.random.uniform(kx2, (batch2, 2), dtype=jnp.float32) * 2.0 - 1.0
    theta2 = jax.random.uniform(kt2, (n_layers2 * N_WIRES * 2,),
                                dtype=jnp.float32)
    y2 = qmodel_forward(x2, theta2, n_layers2)
    y2 = jax.block_until_ready(y2)
    y2_ref = _ref_forward(np.asarray(x2), np.asarray(theta2), n_layers2)
    np.testing.assert_allclose(np.asarray(y2), y2_ref, rtol=1e-4, atol=1e-5)

    print("KERNEL_OK")
</pallas_src>

<mosaic_0001>
module attributes {stable_mosaic.version = 11 : i64} {
  func.func @qcircuit_kernel(%arg0: i32, %arg1: memref<64xf32, #tpu.memory_space<smem>>, %arg2: memref<2x8x128xf32, #tpu.memory_space<vmem>>, %arg3: memref<3x8x128xf32, #tpu.memory_space<vmem>>) attributes {dimension_semantics = [#tpu.dimension_semantics<parallel>], iteration_bounds = array<i64: 1>, scalar_prefetch = 1 : i64, scratch_operands = 0 : i64, tpu.core_type = #tpu.core_type<tc>, window_params = [{transform_indices = @transform_0, window_bounds = array<i64: 2, 8, 128>}, {transform_indices = @transform_1, window_bounds = array<i64: 3, 8, 128>}]} {
    %c0 = arith.constant 0 : index
    %c0_0 = arith.constant 0 : index
    %c0_1 = arith.constant 0 : index
    %0 = vector.load %arg2[%c0, %c0_0, %c0_1] : memref<2x8x128xf32, #tpu.memory_space<vmem>>, vector<1x8x128xf32>
    %1 = vector.shape_cast %0 : vector<1x8x128xf32> to vector<8x128xf32>
    %c1 = arith.constant 1 : index
    %c0_2 = arith.constant 0 : index
    %c0_3 = arith.constant 0 : index
    %2 = vector.load %arg2[%c1, %c0_2, %c0_3] : memref<2x8x128xf32, #tpu.memory_space<vmem>>, vector<1x8x128xf32>
    %3 = vector.shape_cast %2 : vector<1x8x128xf32> to vector<8x128xf32>
    %cst = arith.constant 5.000000e-01 : f32
    %4 = vector.broadcast %cst : f32 to vector<8x128xf32>
    %5 = arith.mulf %4, %1 : vector<8x128xf32>
    %6 = math.cos %5 : vector<8x128xf32>
    %cst_4 = arith.constant 5.000000e-01 : f32
    %7 = vector.broadcast %cst_4 : f32 to vector<8x128xf32>
    %8 = arith.mulf %7, %1 : vector<8x128xf32>
    %9 = math.sin %8 : vector<8x128xf32>
    %cst_5 = arith.constant 5.000000e-01 : f32
    %10 = vector.broadcast %cst_5 : f32 to vector<8x128xf32>
    %11 = arith.mulf %10, %3 : vector<8x128xf32>
    %12 = math.cos %11 : vector<8x128xf32>
    %cst_6 = arith.constant 5.000000e-01 : f32
    %13 = vector.broadcast %cst_6 : f32 to vector<8x128xf32>
    %14 = arith.mulf %13, %3 : vector<8x128xf32>
    %15 = math.sin %14 : vector<8x128xf32>
    %16 = arith.mulf %6, %12 : vector<8x128xf32>
    %17 = arith.mulf %9, %15 : vector<8x128xf32>
    %cst_7 = arith.constant 0.000000e+00 : f32
    %18 = vector.broadcast %cst_7 : f32 to vector<8x128xf32>
    %19 = arith.subf %18, %17 : vector<8x128xf32>
    %20 = arith.mulf %6, %15 : vector<8x128xf32>
    %cst_8 = arith.constant 0.000000e+00 : f32
    %21 = vector.broadcast %cst_8 : f32 to vector<8x128xf32>
    %22 = arith.subf %21, %20 : vector<8x128xf32>
    %23 = arith.mulf %9, %12 : vector<8x128xf32>
    %cst_9 = arith.constant 0.000000e+00 : f32
    %24 = vector.broadcast %cst_9 : f32 to vector<8x128xf32>
    %25 = arith.subf %24, %23 : vector<8x128xf32>
    %c0_10 = arith.constant 0 : index
    %26 = memref.load %arg1[%c0_10] : memref<64xf32, #tpu.memory_space<smem>>
    %27 = vector.broadcast %26 : f32 to vector<8x128xf32>
    %28 = arith.mulf %27, %16 : vector<8x128xf32>
    %c6 = arith.constant 6 : index
    %29 = memref.load %arg1[%c6] : memref<64xf32, #tpu.memory_space<smem>>
    %30 = vector.broadcast %29 : f32 to vector<8x128xf32>
    %31 = arith.mulf %30, %19 : vector<8x128xf32>
    %32 = arith.addf %28, %31 : vector<8x128xf32>
    %c2 = arith.constant 2 : index
    %33 = memref.load %arg1[%c2] : memref<64xf32, #tpu.memory_space<smem>>
    %34 = vector.broadcast %33 : f32 to vector<8x128xf32>
    %35 = arith.mulf %34, %22 : vector<8x128xf32>
    %c4 = arith.constant 4 : index
    %36 = memref.load %arg1[%c4] : memref<64xf32, #tpu.memory_space<smem>>
    %37 = vector.broadcast %36 : f32 to vector<8x128xf32>
    %38 = arith.mulf %37, %25 : vector<8x128xf32>
    %39 = arith.addf %35, %38 : vector<8x128xf32>
    %40 = arith.mulf %32, %32 : vector<8x128xf32>
    %41 = arith.mulf %39, %39 : vector<8x128xf32>
    %42 = arith.addf %40, %41 : vector<8x128xf32>
    %c8 = arith.constant 8 : index
    %43 = memref.load %arg1[%c8] : memref<64xf32, #tpu.memory_space<smem>>
    %44 = vector.broadcast %43 : f32 to vector<8x128xf32>
    %45 = arith.mulf %44, %16 : vector<8x128xf32>
    %c14 = arith.constant 14 : index
    %46 = memref.load %arg1[%c14] : memref<64xf32, #tpu.memory_space<smem>>
    %47 = vector.broadcast %46 : f32 to vector<8x128xf32>
    %48 = arith.mulf %47, %19 : vector<8x128xf32>
    %49 = arith.addf %45, %48 : vector<8x128xf32>
    %c10 = arith.constant 10 : index
    %50 = memref.load %arg1[%c10] : memref<64xf32, #tpu.memory_space<smem>>
    %51 = vector.broadcast %50 : f32 to vector<8x128xf32>
    %52 = arith.mulf %51, %22 : vector<8x128xf32>
    %c12 = arith.constant 12 : index
    %53 = memref.load %arg1[%c12] : memref<64xf32, #tpu.memory_space<smem>>
    %54 = vector.broadcast %53 : f32 to vector<8x128xf32>
    %55 = arith.mulf %54, %25 : vector<8x128xf32>
    %56 = arith.addf %52, %55 : vector<8x128xf32>
    %57 = arith.mulf %49, %49 : vector<8x128xf32>
    %58 = arith.mulf %56, %56 : vector<8x128xf32>
    %59 = arith.addf %57, %58 : vector<8x128xf32>
    %60 = arith.addf %42, %59 : vector<8x128xf32>
    %61 = arith.addf %42, %59 : vector<8x128xf32>
    %62 = arith.subf %42, %59 : vector<8x128xf32>
    %c16 = arith.constant 16 : index
    %63 = memref.load %arg1[%c16] : memref<64xf32, #tpu.memory_space<smem>>
    %64 = vector.broadcast %63 : f32 to vector<8x128xf32>
    %65 = arith.mulf %64, %16 : vector<8x128xf32>
    %c22 = arith.constant 22 : index
    %66 = memref.load %arg1[%c22] : memref<64xf32, #tpu.memory_space<smem>>
    %67 = vector.broadcast %66 : f32 to vector<8x128xf32>
    %68 = arith.mulf %67, %19 : vector<8x128xf32>
    %69 = arith.addf %65, %68 : vector<8x128xf32>
    %c18 = arith.constant 18 : index
    %70 = memref.load %arg1[%c18] : memref<64xf32, #tpu.memory_space<smem>>
    %71 = vector.broadcast %70 : f32 to vector<8x128xf32>
    %72 = arith.mulf %71, %22 : vector<8x128xf32>
    %c20 = arith.constant 20 : index
    %73 = memref.load %arg1[%c20] : memref<64xf32, #tpu.memory_space<smem>>
    %74 = vector.broadcast %73 : f32 to vector<8x128xf32>
    %75 = arith.mulf %74, %25 : vector<8x128xf32>
    %76 = arith.addf %72, %75 : vector<8x128xf32>
    %77 = arith.mulf %69, %69 : vector<8x128xf32>
    %78 = arith.mulf %76, %76 : vector<8x128xf32>
    %79 = arith.addf %77, %78 : vector<8x128xf32>
    %80 = arith.addf %60, %79 : vector<8x128xf32>
    %81 = arith.subf %61, %79 : vector<8x128xf32>
    %82 = arith.addf %62, %79 : vector<8x128xf32>
    %c24 = arith.constant 24 : index
    %83 = memref.load %arg1[%c24] : memref<64xf32, #tpu.memory_space<smem>>
    %84 = vector.broadcast %83 : f32 to vector<8x128xf32>
    %85 = arith.mulf %84, %16 : vector<8x128xf32>
    %c30 = arith.constant 30 : index
    %86 = memref.load %arg1[%c30] : memref<64xf32, #tpu.memory_space<smem>>
    %87 = vector.broadcast %86 : f32 to vector<8x128xf32>
    %88 = arith.mulf %87, %19 : vector<8x128xf32>
    %89 = arith.addf %85, %88 : vector<8x128xf32>
    %c26 = arith.constant 26 : index
    %90 = memref.load %arg1[%c26] : memref<64xf32, #tpu.memory_space<smem>>
    %91 = vector.broadcast %90 : f32 to vector<8x128xf32>
    %92 = arith.mulf %91, %22 : vector<8x128xf32>
    %c28 = arith.constant 28 : index
    %93 = memref.load %arg1[%c28] : memref<64xf32, #tpu.memory_space<smem>>
    %94 = vector.broadcast %93 : f32 to vector<8x128xf32>
    %95 = arith.mulf %94, %25 : vector<8x128xf32>
    %96 = arith.addf %92, %95 : vector<8x128xf32>
    %97 = arith.mulf %89, %89 : vector<8x128xf32>
    %98 = arith.mulf %96, %96 : vector<8x128xf32>
    %99 = arith.addf %97, %98 : vector<8x128xf32>
    %100 = arith.addf %80, %99 : vector<8x128xf32>
    %101 = arith.subf %81, %99 : vector<8x128xf32>
    %102 = arith.subf %82, %99 : vector<8x128xf32>
    %c32 = arith.constant 32 : index
    %103 = memref.load %arg1[%c32] : memref<64xf32, #tpu.memory_space<smem>>
    %104 = vector.broadcast %103 : f32 to vector<8x128xf32>
    %105 = arith.mulf %104, %16 : vector<8x128xf32>
    %c38 = arith.constant 38 : index
    %106 = memref.load %arg1[%c38] : memref<64xf32, #tpu.memory_space<smem>>
    %107 = vector.broadcast %106 : f32 to vector<8x128xf32>
    %108 = arith.mulf %107, %19 : vector<8x128xf32>
    %109 = arith.addf %105, %108 : vector<8x128xf32>
    %c34 = arith.constant 34 : index
    %110 = memref.load %arg1[%c34] : memref<64xf32, #tpu.memory_space<smem>>
    %111 = vector.broadcast %110 : f32 to vector<8x128xf32>
    %112 = arith.mulf %111, %22 : vector<8x128xf32>
    %c36 = arith.constant 36 : index
    %113 = memref.load %arg1[%c36] : memref<64xf32, #tpu.memory_space<smem>>
    %114 = vector.broadcast %113 : f32 to vector<8x128xf32>
    %115 = arith.mulf %114, %25 : vector<8x128xf32>
    %116 = arith.addf %112, %115 : vector<8x128xf32>
    %117 = arith.mulf %109, %109 : vector<8x128xf32>
    %118 = arith.mulf %116, %116 : vector<8x128xf32>
    %119 = arith.addf %117, %118 : vector<8x128xf32>
    %120 = arith.subf %100, %119 : vector<8x128xf32>
    %121 = arith.addf %101, %119 : vector<8x128xf32>
    %122 = arith.addf %102, %119 : vector<8x128xf32>
    %c40 = arith.constant 40 : index
    %123 = memref.load %arg1[%c40] : memref<64xf32, #tpu.memory_space<smem>>
    %124 = vector.broadcast %123 : f32 to vector<8x128xf32>
    %125 = arith.mulf %124, %16 : vector<8x128xf32>
    %c46 = arith.constant 46 : index
    %126 = memref.load %arg1[%c46] : memref<64xf32, #tpu.memory_space<smem>>
    %127 = vector.broadcast %126 : f32 to vector<8x128xf32>
    %128 = arith.mulf %127, %19 : vector<8x128xf32>
    %129 = arith.addf %125, %128 : vector<8x128xf32>
    %c42 = arith.constant 42 : index
    %130 = memref.load %arg1[%c42] : memref<64xf32, #tpu.memory_space<smem>>
    %131 = vector.broadcast %130 : f32 to vector<8x128xf32>
    %132 = arith.mulf %131, %22 : vector<8x128xf32>
    %c44 = arith.constant 44 : index
    %133 = memref.load %arg1[%c44] : memref<64xf32, #tpu.memory_space<smem>>
    %134 = vector.broadcast %133 : f32 to vector<8x128xf32>
    %135 = arith.mulf %134, %25 : vector<8x128xf32>
    %136 = arith.addf %132, %135 : vector<8x128xf32>
    %137 = arith.mulf %129, %129 : vector<8x128xf32>
    %138 = arith.mulf %136, %136 : vector<8x128xf32>
    %139 = arith.addf %137, %138 : vector<8x128xf32>
    %140 = arith.subf %120, %139 : vector<8x128xf32>
    %141 = arith.addf %121, %139 : vector<8x128xf32>
    %142 = arith.subf %122, %139 : vector<8x128xf32>
    %c48 = arith.constant 48 : index
    %143 = memref.load %arg1[%c48] : memref<64xf32, #tpu.memory_space<smem>>
    %144 = vector.broadcast %143 : f32 to vector<8x128xf32>
    %145 = arith.mulf %144, %16 : vector<8x128xf32>
    %c54 = arith.constant 54 : index
    %146 = memref.load %arg1[%c54] : memref<64xf32, #tpu.memory_space<smem>>
    %147 = vector.broadcast %146 : f32 to vector<8x128xf32>
    %148 = arith.mulf %147, %19 : vector<8x128xf32>
    %149 = arith.addf %145, %148 : vector<8x128xf32>
    %c50 = arith.constant 50 : index
    %150 = memref.load %arg1[%c50] : memref<64xf32, #tpu.memory_space<smem>>
    %151 = vector.broadcast %150 : f32 to vector<8x128xf32>
    %152 = arith.mulf %151, %22 : vector<8x128xf32>
    %c52 = arith.constant 52 : index
    %153 = memref.load %arg1[%c52] : memref<64xf32, #tpu.memory_space<smem>>
    %154 = vector.broadcast %153 : f32 to vector<8x128xf32>
    %155 = arith.mulf %154, %25 : vector<8x128xf32>
    %156 = arith.addf %152, %155 : vector<8x128xf32>
    %157 = arith.mulf %149, %149 : vector<8x128xf32>
    %158 = arith.mulf %156, %156 : vector<8x128xf32>
    %159 = arith.addf %157, %158 : vector<8x128xf32>
    %160 = arith.subf %140, %159 : vector<8x128xf32>
    %161 = arith.subf %141, %159 : vector<8x128xf32>
    %162 = arith.addf %142, %159 : vector<8x128xf32>
    %c56 = arith.constant 56 : index
    %163 = memref.load %arg1[%c56] : memref<64xf32, #tpu.memory_space<smem>>
    %164 = vector.broadcast %163 : f32 to vector<8x128xf32>
    %165 = arith.mulf %164, %16 : vector<8x128xf32>
    %c62 = arith.constant 62 : index
    %166 = memref.load %arg1[%c62] : memref<64xf32, #tpu.memory_space<smem>>
    %167 = vector.broadcast %166 : f32 to vector<8x128xf32>
    %168 = arith.mulf %167, %19 : vector<8x128xf32>
    %169 = arith.addf %165, %168 : vector<8x128xf32>
    %c58 = arith.constant 58 : index
    %170 = memref.load %arg1[%c58] : memref<64xf32, #tpu.memory_space<smem>>
    %171 = vector.broadcast %170 : f32 to vector<8x128xf32>
    %172 = arith.mulf %171, %22 : vector<8x128xf32>
    %c60 = arith.constant 60 : index
    %173 = memref.load %arg1[%c60] : memref<64xf32, #tpu.memory_space<smem>>
    %174 = vector.broadcast %173 : f32 to vector<8x128xf32>
    %175 = arith.mulf %174, %25 : vector<8x128xf32>
    %176 = arith.addf %172, %175 : vector<8x128xf32>
    %177 = arith.mulf %169, %169 : vector<8x128xf32>
    %178 = arith.mulf %176, %176 : vector<8x128xf32>
    %179 = arith.addf %177, %178 : vector<8x128xf32>
    %180 = arith.subf %160, %179 : vector<8x128xf32>
    %181 = arith.subf %161, %179 : vector<8x128xf32>
    %182 = arith.subf %162, %179 : vector<8x128xf32>
    %cst_11 = arith.constant 0.000000e+00 : f32
    %183 = vector.broadcast %cst_11 : f32 to vector<8x128xf32>
    %184 = arith.maximumf %180, %183 : vector<8x128xf32>
    %c0_12 = arith.constant 0 : index
    %c0_13 = arith.constant 0 : index
    %c0_14 = arith.constant 0 : index
    %185 = vector.load %arg3[%c0_12, %c0_13, %c0_14] : memref<3x8x128xf32, #tpu.memory_space<vmem>>, vector<1x8x128xf32>
    %186 = vector.shape_cast %185 : vector<1x8x128xf32> to vector<8x128xf32>
    %187 = vector.shape_cast %184 : vector<8x128xf32> to vector<1x8x128xf32>
    tpu.vector_store %arg3[%c0_12, %c0_13, %c0_14], %187 {strides = array<i32>} : memref<3x8x128xf32, #tpu.memory_space<vmem>>, vector<1x8x128xf32>,
    %cst_15 = arith.constant 0.000000e+00 : f32
    %188 = vector.broadcast %cst_15 : f32 to vector<8x128xf32>
    %189 = arith.maximumf %181, %188 : vector<8x128xf32>
    %c1_16 = arith.constant 1 : index
    %c0_17 = arith.constant 0 : index
    %c0_18 = arith.constant 0 : index
    %190 = vector.load %arg3[%c1_16, %c0_17, %c0_18] : memref<3x8x128xf32, #tpu.memory_space<vmem>>, vector<1x8x128xf32>
    %191 = vector.shape_cast %190 : vector<1x8x128xf32> to vector<8x128xf32>
    %192 = vector.shape_cast %189 : vector<8x128xf32> to vector<1x8x128xf32>
    tpu.vector_store %arg3[%c1_16, %c0_17, %c0_18], %192 {strides = array<i32>} : memref<3x8x128xf32, #tpu.memory_space<vmem>>, vector<1x8x128xf32>,
    %cst_19 = arith.constant 0.000000e+00 : f32
    %193 = vector.broadcast %cst_19 : f32 to vector<8x128xf32>
    %194 = arith.maximumf %182, %193 : vector<8x128xf32>
    %c2_20 = arith.constant 2 : index
    %c0_21 = arith.constant 0 : index
    %c0_22 = arith.constant 0 : index
    %195 = vector.load %arg3[%c2_20, %c0_21, %c0_22] : memref<3x8x128xf32, #tpu.memory_space<vmem>>, vector<1x8x128xf32>
    %196 = vector.shape_cast %195 : vector<1x8x128xf32> to vector<8x128xf32>
    %197 = vector.shape_cast %194 : vector<8x128xf32> to vector<1x8x128xf32>
    tpu.vector_store %arg3[%c2_20, %c0_21, %c0_22], %197 {strides = array<i32>} : memref<3x8x128xf32, #tpu.memory_space<vmem>>, vector<1x8x128xf32>,
    return
  }
  func.func @transform_0(%arg0: i32, %arg1: memref<64xf32, #tpu.memory_space<smem>>) -> (i32, i32, i32) {
    %c0_i32 = arith.constant 0 : i32
    %c0_i32_0 = arith.constant 0 : i32
    %c0_i32_1 = arith.constant 0 : i32
    return %c0_i32, %arg0, %c0_i32_0 : i32, i32, i32
  }
  func.func @transform_1(%arg0: i32, %arg1: memref<64xf32, #tpu.memory_space<smem>>) -> (i32, i32, i32) {
    %c0_i32 = arith.constant 0 : i32
    %c0_i32_0 = arith.constant 0 : i32
    %c0_i32_1 = arith.constant 0 : i32
    return %c0_i32, %arg0, %c0_i32_0 : i32, i32, i32
  }
}

</mosaic_0001>

<llo_original>
// kernel: tpu_custom_call.1
$region0: #{tpu_custom_call.1}
  #allocation0 [shape = 'u32[]', space=smem, size = 0x4, offset = 0x4, fixed_abs, tag = 'smem constant byte address 0x4 - core index']
  #allocation1 [shape = 'u32[144,128]{1,0:T(1,128)}', space=vmem, size = 0x12000, scoped, tag = 'internal scratch']
  #allocation2 [shape = 's32[1]{0}', space=sflag, size = 0x4, scoped, tag = 'scoped memory for tpu_custom_call.1']
  #allocation3 [shape = 'u8[512]{0}', space=smem, size = 0x200, scoped, tag = 'prefetched SMEM operand 0']
  %s0 = inlined_call_operand.hbm [shape: f32[64], index: 0, kind: input, shape index: {}]
  %s1 = inlined_call_operand.hbm [shape: f32[2,8,128], index: 1, kind: input, shape index: {}]
  %s2 = inlined_call_operand.hbm [shape: f32[3,8,128], index: 2, kind: output, shape index: {}]
  %s3 = sld [smem:[#allocation0]]
  $region18: #{tpu_custom_call.1} parent=0
    _
  %s5 = ssub.s32 1, %s3
  %s6 = scalar_select 0, %s5, %s3
  %8 = dma.hbm_to_smem %s0, 16, [#allocation3], [#allocation2]
  %9 = dma.done [#allocation2], 16
  %10 = sfence
  $region1: #{tpu_custom_call.1} parent=0
    #allocation4 [shape = 'u8[8192]{0}', space=vmem, size = 0x2000, scoped, tag = 'input window, operand 1, single buffered']
    #allocation5 [shape = 's32[1]{0}', space=sflag, size = 0x4, scoped, tag = 'scoped memory for tpu_custom_call.1']
    #allocation6 [shape = 's32[1]{0}', space=sflag, size = 0x4, scoped, tag = 'scoped memory for tpu_custom_call.1']
    #allocation7 [shape = 'u8[12288]{0}', space=vmem, size = 0x3000, scoped, tag = 'output window, operand 0, single buffered']
    %11 = vsyncpa [#allocation5], 0
    %12 = vsyncpa [#allocation6], 0
    // Predicated region
    $region2: #{tpu_custom_call.1} parent=1 // pred_check
      _
    $region3: #{tpu_custom_call.1} parent=1 // pred_check_branch
      %14 = sbr.rel (0) target = $region5
    $region4: #{tpu_custom_call.1} parent=1 // pred_region
      %s16 = ssub.s32 256, 256
      %17 = vsyncadd [#allocation5], %s16
      %s18 = sshll.u32 [#allocation4], 4
      %s19 = int_to_ptr.vmem [resolvable:$true] %s18
      %24 = dma.hbm_to_vmem [thread:$0]  %s1, 256, %s19, [#allocation5], 128, 128, 8
    $region5: #{tpu_custom_call.1} parent=1 // pred_fallthru
      _
    // Predicated region
    $region6: #{tpu_custom_call.1} parent=1 // pred_check
      _
    $region7: #{tpu_custom_call.1} parent=1 // pred_check_branch
      %26 = sbr.rel (0) target = $region9
    $region8: #{tpu_custom_call.1} parent=1 // pred_region
      %27 = dma.done [#allocation5], 256
    $region9: #{tpu_custom_call.1} parent=1 // pred_fallthru
      _
    %v28 = vld [vmem:[#allocation4] sm:$0xff]
    %s29 = scalar_lea.vmem [#allocation4], 8
    %v30 = vld [vmem:[%s29] sm:$0xff]
    %v31 = vmul.f32 %v28, 0.5
    %v32 = vand.u32 2147483647, %v31
    %vm33 = vcmp.le.f32.partialorder %v32, 0.7853982
    %vm34 = vcmp.lt.s32.totalorder %v31, 0
    %v35 = vand.u32 %v31, 2139095040
    %v36 = vshrl.u32 %v35, 23
    %v37 = vsub.s32 %v36, 127
    %v38 = vand.u32 2147483647, %v31
    %v39 = vand.u32 %v38, 8388607
    %v40 = vor.u32 %v39, 8388608
    %v41 = vsub.s32 0, %v40
    %v42 = vadd.s32 %v37, 1
    %vm43 = vcmp.gt.s32.totalorder %v42, 0
    %v44 = vsel %vm43, %v42, 0
    %v45 = vshrl.u32 %v44, 5
    %v46 = vand.u32 %v44, 31
    %v47 = vsub.s32 32, %v46
    %v48 = vshrl.u32 683565275, %v47
    %v49 = vshll.u32 683565275, %v46
    %v50 = vshrl.u32 2475754826, %v47
    %v51 = vor.u32 %v49, %v50
    %v52 = vshll.u32 2475754826, %v46
    %v53 = vshrl.u32 2131351028, %v47
    %v54 = vor.u32 %v52, %v53
    %v55 = vshll.u32 2131351028, %v46
    %v56 = vshrl.u32 2102212464, %v47
    %v57 = vor.u32 %v55, %v56
    %v58 = vshll.u32 2102212464, %v46
    %v59 = vshrl.u32 920167782, %v47
    %v60 = vor.u32 %v58, %v59
    %v61 = vshll.u32 920167782, %v46
    %v62 = vshrl.u32 1326507024, %v47
    %v63 = vor.u32 %v61, %v62
    %vm64 = vcmp.lt.s32.totalorder %v45, 1
    %vm65 = vcmp.lt.s32.totalorder %v45, 2
    %vm66 = vcmp.lt.s32.totalorder %v45, 3
    %vm67 = vcmp.lt.s32.totalorder %v45, 4
    %v68 = vsel %vm64, %v48, %v51
    %v69 = vsel %vm67, %v57, 2102212464
    %v70 = vsel %vm66, %v54, %v69
    %v71 = vsel %vm65, %v68, %v70
    %v72 = vsel %vm64, %v51, %v54
    %v73 = vsel %vm67, %v60, 920167782
    %v74 = vsel %vm66, %v57, %v73
    %v75 = vsel %vm65, %v72, %v74
    %v76 = vsel %vm64, %v54, %v57
    %v77 = vsel %vm67, %v63, 1326507024
    %v78 = vsel %vm66, %v60, %v77
    %v79 = vsel %vm65, %v76, %v78
    %v80 = vshll.u32 %v40, 8
    %v81 = vmul.u32.u64.compose %v80, %v79
    %v82 = vextract.low.u32 %v81
    %v83 = vextract.high.u32 %v81
    %v84 = vmul.u32.u64.compose %v80, %v75
    %v85 = vextract.low.u32 %v84
    %v86 = vextract.high.u32 %v84
    %v87 = vmul.u32 %v80, %v71
    %v88 = vadd.s32 %v83, %v85
    %vm89 = vc.u32 %v83, %v85
    %v90 = vadd.s32 %v86, 1
    %v91 = vsel %vm89, %v90, %v86
    %v92 = vadd.s32 %v87, %v91
    %v93 = vadd.s32 %v92, 536870912
    %v94 = vshrl.u32 %v93, 30
    %v95 = vshll.u32 %v94, 30
    %v96 = vsub.s32 %v92, %v95
    %vm97 = vcmp.lt.s32.totalorder %v96, 0
    %v98 = vsub.s32 0, %v96
    %v99 = vsel %vm97, %v98, %v96
    %v100 = vclz %v99
    %v101 = vsub.s32 %v100, 2
    %vm102 = vcmp.gt.s32.totalorder 0, %v101
    %v103 = vsel %vm102, 0, %v101
    %v104 = vsub.s32 32, %v103
    %v105 = vshll.u32 %v96, %v103
    %v106 = vshrl.u32 %v88, %v104
    %v107 = vor.u32 %v105, %v106
    %v108 = vsub.s32 4294967266, %v103
    %v109 = vadd.s32 %v108, 127
    %v110 = vshll.u32 %v109, 23
    %v111 = vor.u32 4788187, %v110
    %v112 = vand.u32 2147483647, %v111
    %v114 = vcvt.s32.f32 %v107
    %v115 = vmul.f32 %v114, %v112
    %v116 = vxor.u32 %v115, 2147483648
    %v117 = vsel %vm34, %v116, %v115
    %v118 = vsub.s32 4, %v94
    %v119 = vsel %vm34, %v118, %v94
    %v120 = vsel %vm33, %v31, %v117
    %v121 = vsel %vm33, 0, %v119
    %v122 = vcosq.f32.pop %v120
    %v123 = vsinq.f32.pop %v120
    %vm124 = vweird.f32 %v31
    %v125 = vand.u32 %v121, 3
    %vm126 = vcmp.lt.s32.totalorder %v125, 2
    %vm127 = vcmp.eq.s32.totalorder %v125, 0
    %v128 = vxor.u32 %v123, 2147483648
    %v129 = vsel %vm127, %v122, %v128
    %vm130 = vcmp.eq.s32.totalorder %v125, 2
    %v131 = vxor.u32 %v122, 2147483648
    %v132 = vsel %vm130, %v131, %v123
    %v133 = vsel %vm126, %v129, %v132
    %v134 = vsel %vm124, nan, %v133
    %v135 = vand.u32 2147483647, %v31
    %vm136 = vcmp.le.f32.partialorder %v135, 0.7853982
    %vm137 = vcmp.lt.s32.totalorder %v31, 0
    %v138 = vand.u32 %v31, 2139095040
    %v139 = vshrl.u32 %v138, 23
    %v140 = vsub.s32 %v139, 127
    %v141 = vand.u32 2147483647, %v31
    %v142 = vand.u32 %v141, 8388607
    %v143 = vor.u32 %v142, 8388608
    %v144 = vsub.s32 0, %v143
    %v145 = vadd.s32 %v140, 1
    %vm146 = vcmp.gt.s32.totalorder %v145, 0
    %v147 = vsel %vm146, %v145, 0
    %v148 = vshrl.u32 %v147, 5
    %v149 = vand.u32 %v147, 31
    %v150 = vsub.s32 32, %v149
    %v151 = vshrl.u32 683565275, %v150
    %v152 = vshll.u32 683565275, %v149
    %v153 = vshrl.u32 2475754826, %v150
    %v154 = vor.u32 %v152, %v153
    %v155 = vshll.u32 2475754826, %v149
    %v156 = vshrl.u32 2131351028, %v150
    %v157 = vor.u32 %v155, %v156
    %v158 = vshll.u32 2131351028, %v149
    %v159 = vshrl.u32 2102212464, %v150
    %v160 = vor.u32 %v158, %v159
    %v161 = vshll.u32 2102212464, %v149
    %v162 = vshrl.u32 920167782, %v150
    %v163 = vor.u32 %v161, %v162
    %v164 = vshll.u32 920167782, %v149
    %v165 = vshrl.u32 1326507024, %v150
    %v166 = vor.u32 %v164, %v165
    %vm167 = vcmp.lt.s32.totalorder %v148, 1
    %vm168 = vcmp.lt.s32.totalorder %v148, 2
    %vm169 = vcmp.lt.s32.totalorder %v148, 3
    %vm170 = vcmp.lt.s32.totalorder %v148, 4
    %v171 = vsel %vm167, %v151, %v154
    %v172 = vsel %vm170, %v160, 2102212464
    %v173 = vsel %vm169, %v157, %v172
    %v174 = vsel %vm168, %v171, %v173
    %v175 = vsel %vm167, %v154, %v157
    %v176 = vsel %vm170, %v163, 920167782
    %v177 = vsel %vm169, %v160, %v176
    %v178 = vsel %vm168, %v175, %v177
    %v179 = vsel %vm167, %v157, %v160
    %v180 = vsel %vm170, %v166, 1326507024
    %v181 = vsel %vm169, %v163, %v180
    %v182 = vsel %vm168, %v179, %v181
    %v183 = vshll.u32 %v143, 8
    %v184 = vmul.u32.u64.compose %v183, %v182
    %v185 = vextract.low.u32 %v184
    %v186 = vextract.high.u32 %v184
    %v187 = vmul.u32.u64.compose %v183, %v178
    %v188 = vextract.low.u32 %v187
    %v189 = vextract.high.u32 %v187
    %v190 = vmul.u32 %v183, %v174
    %v191 = vadd.s32 %v186, %v188
    %vm192 = vc.u32 %v186, %v188
    %v193 = vadd.s32 %v189, 1
    %v194 = vsel %vm192, %v193, %v189
    %v195 = vadd.s32 %v190, %v194
    %v196 = vadd.s32 %v195, 536870912
    %v197 = vshrl.u32 %v196, 30
    %v198 = vshll.u32 %v197, 30
    %v199 = vsub.s32 %v195, %v198
    %vm200 = vcmp.lt.s32.totalorder %v199, 0
    %v201 = vsub.s32 0, %v199
    %v202 = vsel %vm200, %v201, %v199
    %v203 = vclz %v202
    %v204 = vsub.s32 %v203, 2
    %vm205 = vcmp.gt.s32.totalorder 0, %v204
    %v206 = vsel %vm205, 0, %v204
    %v207 = vsub.s32 32, %v206
    %v208 = vshll.u32 %v199, %v206
    %v209 = vshrl.u32 %v191, %v207
    %v210 = vor.u32 %v208, %v209
    %v211 = vsub.s32 4294967266, %v206
    %v212 = vadd.s32 %v211, 127
    %v213 = vshll.u32 %v212, 23
    %v214 = vor.u32 4788187, %v213
    %v215 = vand.u32 2147483647, %v214
    %v217 = vcvt.s32.f32 %v210
    %v218 = vmul.f32 %v217, %v215
    %v219 = vxor.u32 %v218, 2147483648
    %v220 = vsel %vm137, %v219, %v218
    %v221 = vsub.s32 4, %v197
    %v222 = vsel %vm137, %v221, %v197
    %v223 = vsel %vm136, %v31, %v220
    %v224 = vsel %vm136, 0, %v222
    %v225 = vcosq.f32.pop %v223
    %v226 = vsinq.f32.pop %v223
    %vm227 = vweird.f32 %v31
    %v228 = vadd.s32 %v224, 3
    %v229 = vand.u32 %v228, 3
    %vm230 = vcmp.lt.s32.totalorder %v229, 2
    %vm231 = vcmp.eq.s32.totalorder %v229, 0
    %v232 = vxor.u32 %v226, 2147483648
    %v233 = vsel %vm231, %v225, %v232
    %vm234 = vcmp.eq.s32.totalorder %v229, 2
    %v235 = vxor.u32 %v225, 2147483648
    %v236 = vsel %vm234, %v235, %v226
    %v237 = vsel %vm230, %v233, %v236
    %v238 = vsel %vm227, nan, %v237
    %v239 = vmul.f32 %v30, 0.5
    %v240 = vand.u32 2147483647, %v239
    %vm241 = vcmp.le.f32.partialorder %v240, 0.7853982
    %vm242 = vcmp.lt.s32.totalorder %v239, 0
    %v243 = vand.u32 %v239, 2139095040
    %v244 = vshrl.u32 %v243, 23
    %v245 = vsub.s32 %v244, 127
    %v246 = vand.u32 2147483647, %v239
    %v247 = vand.u32 %v246, 8388607
    %v248 = vor.u32 %v247, 8388608
    %v249 = vsub.s32 0, %v248
    %v250 = vadd.s32 %v245, 1
    %vm251 = vcmp.gt.s32.totalorder %v250, 0
    %v252 = vsel %vm251, %v250, 0
    %v253 = vshrl.u32 %v252, 5
    %v254 = vand.u32 %v252, 31
    %v255 = vsub.s32 32, %v254
    %v256 = vshrl.u32 683565275, %v255
    %v257 = vshll.u32 683565275, %v254
    %v258 = vshrl.u32 2475754826, %v255
    %v259 = vor.u32 %v257, %v258
    %v260 = vshll.u32 2475754826, %v254
    %v261 = vshrl.u32 2131351028, %v255
    %v262 = vor.u32 %v260, %v261
    %v263 = vshll.u32 2131351028, %v254
    %v264 = vshrl.u32 2102212464, %v255
    %v265 = vor.u32 %v263, %v264
    %v266 = vshll.u32 2102212464, %v254
    %v267 = vshrl.u32 920167782, %v255
    %v268 = vor.u32 %v266, %v267
    %v269 = vshll.u32 920167782, %v254
    %v270 = vshrl.u32 1326507024, %v255
    %v271 = vor.u32 %v269, %v270
    %vm272 = vcmp.lt.s32.totalorder %v253, 1
    %vm273 = vcmp.lt.s32.totalorder %v253, 2
    %vm274 = vcmp.lt.s32.totalorder %v253, 3
    %vm275 = vcmp.lt.s32.totalorder %v253, 4
    %v276 = vsel %vm272, %v256, %v259
    %v277 = vsel %vm275, %v265, 2102212464
    %v278 = vsel %vm274, %v262, %v277
    %v279 = vsel %vm273, %v276, %v278
    %v280 = vsel %vm272, %v259, %v262
    %v281 = vsel %vm275, %v268, 920167782
    %v282 = vsel %vm274, %v265, %v281
    %v283 = vsel %vm273, %v280, %v282
    %v284 = vsel %vm272, %v262, %v265
    %v285 = vsel %vm275, %v271, 1326507024
    %v286 = vsel %vm274, %v268, %v285
    %v287 = vsel %vm273, %v284, %v286
    %v288 = vshll.u32 %v248, 8
    %v289 = vmul.u32.u64.compose %v288, %v287
    %v290 = vextract.low.u32 %v289
    %v291 = vextract.high.u32 %v289
    %v292 = vmul.u32.u64.compose %v288, %v283
    %v293 = vextract.low.u32 %v292
    %v294 = vextract.high.u32 %v292
    %v295 = vmul.u32 %v288, %v279
    %v296 = vadd.s32 %v291, %v293
    %vm297 = vc.u32 %v291, %v293
    %v298 = vadd.s32 %v294, 1
    %v299 = vsel %vm297, %v298, %v294
    %v300 = vadd.s32 %v295, %v299
    %v301 = vadd.s32 %v300, 536870912
    %v302 = vshrl.u32 %v301, 30
    %v303 = vshll.u32 %v302, 30
    %v304 = vsub.s32 %v300, %v303
    %vm305 = vcmp.lt.s32.totalorder %v304, 0
    %v306 = vsub.s32 0, %v304
    %v307 = vsel %vm305, %v306, %v304
    %v308 = vclz %v307
    %v309 = vsub.s32 %v308, 2
    %vm310 = vcmp.gt.s32.totalorder 0, %v309
    %v311 = vsel %vm310, 0, %v309
    %v312 = vsub.s32 32, %v311
    %v313 = vshll.u32 %v304, %v311
    %v314 = vshrl.u32 %v296, %v312
    %v315 = vor.u32 %v313, %v314
    %v316 = vsub.s32 4294967266, %v311
    %v317 = vadd.s32 %v316, 127
    %v318 = vshll.u32 %v317, 23
    %v319 = vor.u32 4788187, %v318
    %v320 = vand.u32 2147483647, %v319
    %v322 = vcvt.s32.f32 %v315
    %v323 = vmul.f32 %v322, %v320
    %v324 = vxor.u32 %v323, 2147483648
    %v325 = vsel %vm242, %v324, %v323
    %v326 = vsub.s32 4, %v302
    %v327 = vsel %vm242, %v326, %v302
    %v328 = vsel %vm241, %v239, %v325
    %v329 = vsel %vm241, 0, %v327
    %v330 = vcosq.f32.pop %v328
    %v331 = vsinq.f32.pop %v328
    %vm332 = vweird.f32 %v239
    %v333 = vand.u32 %v329, 3
    %vm334 = vcmp.lt.s32.totalorder %v333, 2
    %vm335 = vcmp.eq.s32.totalorder %v333, 0
    %v336 = vxor.u32 %v331, 2147483648
    %v337 = vsel %vm335, %v330, %v336
    %vm338 = vcmp.eq.s32.totalorder %v333, 2
    %v339 = vxor.u32 %v330, 2147483648
    %v340 = vsel %vm338, %v339, %v331
    %v341 = vsel %vm334, %v337, %v340
    %v342 = vsel %vm332, nan, %v341
    %v343 = vand.u32 2147483647, %v239
    %vm344 = vcmp.le.f32.partialorder %v343, 0.7853982
    %vm345 = vcmp.lt.s32.totalorder %v239, 0
    %v346 = vand.u32 %v239, 2139095040
    %v347 = vshrl.u32 %v346, 23
    %v348 = vsub.s32 %v347, 127
    %v349 = vand.u32 2147483647, %v239
    %v350 = vand.u32 %v349, 8388607
    %v351 = vor.u32 %v350, 8388608
    %v352 = vsub.s32 0, %v351
    %v353 = vadd.s32 %v348, 1
    %vm354 = vcmp.gt.s32.totalorder %v353, 0
    %v355 = vsel %vm354, %v353, 0
    %v356 = vshrl.u32 %v355, 5
    %v357 = vand.u32 %v355, 31
    %v358 = vsub.s32 32, %v357
    %v359 = vshrl.u32 683565275, %v358
    %v360 = vshll.u32 683565275, %v357
    %v361 = vshrl.u32 2475754826, %v358
    %v362 = vor.u32 %v360, %v361
    %v363 = vshll.u32 2475754826, %v357
    %v364 = vshrl.u32 2131351028, %v358
    %v365 = vor.u32 %v363, %v364
    %v366 = vshll.u32 2131351028, %v357
    %v367 = vshrl.u32 2102212464, %v358
    %v368 = vor.u32 %v366, %v367
    %v369 = vshll.u32 2102212464, %v357
    %v370 = vshrl.u32 920167782, %v358
    %v371 = vor.u32 %v369, %v370
    %v372 = vshll.u32 920167782, %v357
    %v373 = vshrl.u32 1326507024, %v358
    %v374 = vor.u32 %v372, %v373
    %vm375 = vcmp.lt.s32.totalorder %v356, 1
    %vm376 = vcmp.lt.s32.totalorder %v356, 2
    %vm377 = vcmp.lt.s32.totalorder %v356, 3
    %vm378 = vcmp.lt.s32.totalorder %v356, 4
    %v379 = vsel %vm375, %v359, %v362
    %v380 = vsel %vm378, %v368, 2102212464
    %v381 = vsel %vm377, %v365, %v380
    %v382 = vsel %vm376, %v379, %v381
    %v383 = vsel %vm375, %v362, %v365
    %v384 = vsel %vm378, %v371, 920167782
    %v385 = vsel %vm377, %v368, %v384
    %v386 = vsel %vm376, %v383, %v385
    %v387 = vsel %vm375, %v365, %v368
    %v388 = vsel %vm378, %v374, 1326507024
    %v389 = vsel %vm377, %v371, %v388
    %v390 = vsel %vm376, %v387, %v389
    %v391 = vshll.u32 %v351, 8
    %v392 = vmul.u32.u64.compose %v391, %v390
    %v393 = vextract.low.u32 %v392
    %v394 = vextract.high.u32 %v392
    %v395 = vmul.u32.u64.compose %v391, %v386
    %v396 = vextract.low.u32 %v395
    %v397 = vextract.high.u32 %v395
    %v398 = vmul.u32 %v391, %v382
    %v399 = vadd.s32 %v394, %v396
    %vm400 = vc.u32 %v394, %v396
    %v401 = vadd.s32 %v397, 1
    %v402 = vsel %vm400, %v401, %v397
    %v403 = vadd.s32 %v398, %v402
    %v404 = vadd.s32 %v403, 536870912
    %v405 = vshrl.u32 %v404, 30
    %v406 = vshll.u32 %v405, 30
    %v407 = vsub.s32 %v403, %v406
    %vm408 = vcmp.lt.s32.totalorder %v407, 0
    %v409 = vsub.s32 0, %v407
    %v410 = vsel %vm408, %v409, %v407
    %v411 = vclz %v410
    %v412 = vsub.s32 %v411, 2
    %vm413 = vcmp.gt.s32.totalorder 0, %v412
    %v414 = vsel %vm413, 0, %v412
    %v415 = vsub.s32 32, %v414
    %v416 = vshll.u32 %v407, %v414
    %v417 = vshrl.u32 %v399, %v415
    %v418 = vor.u32 %v416, %v417
    %v419 = vsub.s32 4294967266, %v414
    %v420 = vadd.s32 %v419, 127
    %v421 = vshll.u32 %v420, 23
    %v422 = vor.u32 4788187, %v421
    %v423 = vand.u32 2147483647, %v422
    %v425 = vcvt.s32.f32 %v418
    %v426 = vmul.f32 %v425, %v423
    %v427 = vxor.u32 %v426, 2147483648
    %v428 = vsel %vm345, %v427, %v426
    %v429 = vsub.s32 4, %v405
    %v430 = vsel %vm345, %v429, %v405
    %v431 = vsel %vm344, %v239, %v428
    %v432 = vsel %vm344, 0, %v430
    %v433 = vcosq.f32.pop %v431
    %v434 = vsinq.f32.pop %v431
    %vm435 = vweird.f32 %v239
    %v436 = vadd.s32 %v432, 3
    %v437 = vand.u32 %v436, 3
    %vm438 = vcmp.lt.s32.totalorder %v437, 2
    %vm439 = vcmp.eq.s32.totalorder %v437, 0
    %v440 = vxor.u32 %v434, 2147483648
    %v441 = vsel %vm439, %v433, %v440
    %vm442 = vcmp.eq.s32.totalorder %v437, 2
    %v443 = vxor.u32 %v433, 2147483648
    %v444 = vsel %vm442, %v443, %v434
    %v445 = vsel %vm438, %v441, %v444
    %v446 = vsel %vm435, nan, %v445
    %v447 = vmul.f32 %v134, %v342
    %v448 = vmul.f32 %v238, %v446
    %v449 = vsub.f32 0.0, %v448
    %v450 = vmul.f32 %v134, %v446
    %v451 = vsub.f32 0.0, %v450
    %v452 = vmul.f32 %v238, %v342
    %v453 = vsub.f32 0.0, %v452
    %s454 = sld [smem:[#allocation3]]
    %v455 = vstv %s454
    %v456 = vmul.f32 %v455, %v447
    %s457 = sld [smem:[#allocation3 + $0x6]]
    %v458 = vstv %s457
    %v459 = vmul.f32 %v458, %v449
    %v460 = vadd.f32 %v456, %v459
    %s461 = sld [smem:[#allocation3 + $0x2]]
    %v462 = vstv %s461
    %v463 = vmul.f32 %v462, %v451
    %s464 = sld [smem:[#allocation3 + $0x4]]
    %v465 = vstv %s464
    %v466 = vmul.f32 %v465, %v453
    %v467 = vadd.f32 %v463, %v466
    %v468 = vmul.f32 %v460, %v460
    %v469 = vmul.f32 %v467, %v467
    %v470 = vadd.f32 %v468, %v469
    %s471 = sld [smem:[#allocation3 + $0x8]]
    %v472 = vstv %s471
    %v473 = vmul.f32 %v472, %v447
    %s474 = sld [smem:[#allocation3 + $0xe]]
    %v475 = vstv %s474
    %v476 = vmul.f32 %v475, %v449
    %v477 = vadd.f32 %v473, %v476
    %s478 = sld [smem:[#allocation3 + $0xa]]
    %v479 = vstv %s478
    %v480 = vmul.f32 %v479, %v451
    %s481 = sld [smem:[#allocation3 + $0xc]]
    %v482 = vstv %s481
    %v483 = vmul.f32 %v482, %v453
    %v484 = vadd.f32 %v480, %v483
    %v485 = vmul.f32 %v477, %v477
    %v486 = vmul.f32 %v484, %v484
    %v487 = vadd.f32 %v485, %v486
    %v488 = vadd.f32 %v470, %v487
    %v489 = vsub.f32 %v470, %v487
    %s490 = sld [smem:[#allocation3 + $0x10]]
    %v491 = vstv %s490
    %v492 = vmul.f32 %v491, %v447
    %s493 = sld [smem:[#allocation3 + $0x16]]
    %v494 = vstv %s493
    %v495 = vmul.f32 %v494, %v449
    %v496 = vadd.f32 %v492, %v495
    %s497 = sld [smem:[#allocation3 + $0x12]]
    %v498 = vstv %s497
    %v499 = vmul.f32 %v498, %v451
    %s500 = sld [smem:[#allocation3 + $0x14]]
    %v501 = vstv %s500
    %v502 = vmul.f32 %v501, %v453
    %v503 = vadd.f32 %v499, %v502
    %v504 = vmul.f32 %v496, %v496
    %v505 = vmul.f32 %v503, %v503
    %v506 = vadd.f32 %v504, %v505
    %v507 = vadd.f32 %v488, %v506
    %v508 = vsub.f32 %v488, %v506
    %v509 = vadd.f32 %v489, %v506
    %s510 = sld [smem:[#allocation3 + $0x18]]
    %v511 = vstv %s510
    %v512 = vmul.f32 %v511, %v447
    %s513 = sld [smem:[#allocation3 + $0x1e]]
    %v514 = vstv %s513
    %v515 = vmul.f32 %v514, %v449
    %v516 = vadd.f32 %v512, %v515
    %s517 = sld [smem:[#allocation3 + $0x1a]]
    %v518 = vstv %s517
    %v519 = vmul.f32 %v518, %v451
    %s520 = sld [smem:[#allocation3 + $0x1c]]
    %v521 = vstv %s520
    %v522 = vmul.f32 %v521, %v453
    %v523 = vadd.f32 %v519, %v522
    %v524 = vmul.f32 %v516, %v516
    %v525 = vmul.f32 %v523, %v523
    %v526 = vadd.f32 %v524, %v525
    %v527 = vadd.f32 %v507, %v526
    %v528 = vsub.f32 %v508, %v526
    %v529 = vsub.f32 %v509, %v526
    %s530 = sld [smem:[#allocation3 + $0x20]]
    %v531 = vstv %s530
    %v532 = vmul.f32 %v531, %v447
    %s533 = sld [smem:[#allocation3 + $0x26]]
    %v534 = vstv %s533
    %v535 = vmul.f32 %v534, %v449
    %v536 = vadd.f32 %v532, %v535
    %s537 = sld [smem:[#allocation3 + $0x22]]
    %v538 = vstv %s537
    %v539 = vmul.f32 %v538, %v451
    %s540 = sld [smem:[#allocation3 + $0x24]]
    %v541 = vstv %s540
    %v542 = vmul.f32 %v541, %v453
    %v543 = vadd.f32 %v539, %v542
    %v544 = vmul.f32 %v536, %v536
    %v545 = vmul.f32 %v543, %v543
    %v546 = vadd.f32 %v544, %v545
    %v547 = vsub.f32 %v527, %v546
    %v548 = vadd.f32 %v528, %v546
    %v549 = vadd.f32 %v529, %v546
    %s550 = sld [smem:[#allocation3 + $0x28]]
    %v551 = vstv %s550
    %v552 = vmul.f32 %v551, %v447
    %s553 = sld [smem:[#allocation3 + $0x2e]]
    %v554 = vstv %s553
    %v555 = vmul.f32 %v554, %v449
    %v556 = vadd.f32 %v552, %v555
    %s557 = sld [smem:[#allocation3 + $0x2a]]
    %v558 = vstv %s557
    %v559 = vmul.f32 %v558, %v451
    %s560 = sld [smem:[#allocation3 + $0x2c]]
    %v561 = vstv %s560
    %v562 = vmul.f32 %v561, %v453
    %v563 = vadd.f32 %v559, %v562
    %v564 = vmul.f32 %v556, %v556
    %v565 = vmul.f32 %v563, %v563
    %v566 = vadd.f32 %v564, %v565
    %v567 = vsub.f32 %v547, %v566
    %v568 = vadd.f32 %v548, %v566
    %v569 = vsub.f32 %v549, %v566
    %s570 = sld [smem:[#allocation3 + $0x30]]
    %v571 = vstv %s570
    %v572 = vmul.f32 %v571, %v447
    %s573 = sld [smem:[#allocation3 + $0x36]]
    %v574 = vstv %s573
    %v575 = vmul.f32 %v574, %v449
    %v576 = vadd.f32 %v572, %v575
    %s577 = sld [smem:[#allocation3 + $0x32]]
    %v578 = vstv %s577
    %v579 = vmul.f32 %v578, %v451
    %s580 = sld [smem:[#allocation3 + $0x34]]
    %v581 = vstv %s580
    %v582 = vmul.f32 %v581, %v453
    %v583 = vadd.f32 %v579, %v582
    %v584 = vmul.f32 %v576, %v576
    %v585 = vmul.f32 %v583, %v583
    %v586 = vadd.f32 %v584, %v585
    %v587 = vsub.f32 %v567, %v586
    %v588 = vsub.f32 %v568, %v586
    %v589 = vadd.f32 %v569, %v586
    %s590 = sld [smem:[#allocation3 + $0x38]]
    %v591 = vstv %s590
    %v592 = vmul.f32 %v591, %v447
    %s593 = sld [smem:[#allocation3 + $0x3e]]
    %v594 = vstv %s593
    %v595 = vmul.f32 %v594, %v449
    %v596 = vadd.f32 %v592, %v595
    %s597 = sld [smem:[#allocation3 + $0x3a]]
    %v598 = vstv %s597
    %v599 = vmul.f32 %v598, %v451
    %s600 = sld [smem:[#allocation3 + $0x3c]]
    %v601 = vstv %s600
    %v602 = vmul.f32 %v601, %v453
    %v603 = vadd.f32 %v599, %v602
    %v604 = vmul.f32 %v596, %v596
    %v605 = vmul.f32 %v603, %v603
    %v606 = vadd.f32 %v604, %v605
    %v607 = vsub.f32 %v587, %v606
    %v608 = vsub.f32 %v588, %v606
    %v609 = vsub.f32 %v589, %v606
    %v610 = vmax.f32 %v607, 0.0
    %611 = vst [vmem:[#allocation7] sm:$0xff] %v610
    %v612 = vmax.f32 %v608, 0.0
    %s613 = scalar_lea.vmem [#allocation7], 8
    %614 = vst [vmem:[%s613] sm:$0xff] %v612
    %v615 = vmax.f32 %v609, 0.0
    %s616 = scalar_lea.vmem [#allocation7], 16
    %617 = vst [vmem:[%s616] sm:$0xff] %v615
    // Predicated region
    $region10: #{tpu_custom_call.1} parent=1 // pred_check
      _
    $region11: #{tpu_custom_call.1} parent=1 // pred_check_branch
      %619 = sbr.rel (0) target = $region13
    $region12: #{tpu_custom_call.1} parent=1 // pred_region
      %s621 = ssub.s32 384, 384
      %622 = vsyncadd [#allocation6], %s621
      %s623 = sshll.u32 [#allocation7], 4
      %s624 = int_to_ptr.vmem [resolvable:$true] %s623
      %629 = dma.vmem_to_hbm [thread:$0]  %s624, 384, %s2, [#allocation6], 128, 128, 8
    $region13: #{tpu_custom_call.1} parent=1 // pred_fallthru
      _
    // Predicated region
    $region14: #{tpu_custom_call.1} parent=1 // pred_check
      _
    $region15: #{tpu_custom_call.1} parent=1 // pred_check_branch
      %631 = sbr.rel (0) target = $region17
    $region16: #{tpu_custom_call.1} parent=1 // pred_region
      %632 = dma.done [#allocation6], 384
    $region17: #{tpu_custom_call.1} parent=1 // pred_fallthru
      _
    %633 = vsyncpa [#allocation5], 1
    %634 = vsyncpa [#allocation6], 1

</llo_original>
